<compile_context>
chip_gen: v7x
topology: tpu7x:2x2x1
jax: 0.10.0
libtpu: 0.0.40
codegen_flags: <defaults>
</compile_context>

<pallas_src>
import math

import jax
import jax.numpy as jnp
from jax.experimental import pallas as pl
from jax.experimental.pallas import tpu as pltpu


def _round_up(x, m):
    return ((x + m - 1) // m) * m


def _policy_kernel(x_ref, w1_ref, b1_ref, wh_ref, bh_ref, out_ref):
    # x_ref:  (TM, num_inputs)          activation tile
    # w1_ref: (num_inputs, hidden)      resident
    # b1_ref: (1, hidden)               resident
    # wh_ref: (hidden, LANES)           fused + lane-padded head weights
    # bh_ref: (1, LANES)                fused + lane-padded head bias
    # out_ref:(TM, LANES)               lane-dense fused output
    x = x_ref[...]
    h = jnp.dot(x, w1_ref[...], preferred_element_type=jnp.float32) + b1_ref[...]
    h = jnp.maximum(h, 0.0)                                  # F.relu(linear1(x))
    out_ref[...] = (jnp.dot(h, wh_ref[...], preferred_element_type=jnp.float32)
                    + bh_ref[...])                           # [linear2 | linear2_]


def policy_forward(x, params):
    """Pallas implementation of Policy.forward. Returns (mu, sigma_sq)."""
    w1, b1, w2, b2, w2s, b2s = params
    num_inputs, hidden = w1.shape
    num_outputs = w2.shape[1]
    batch = x.shape[0]

    # --- Fuse the two heads and pad to a lane-dense (multiple-of-128) width ---
    head_w = jnp.concatenate([w2, w2s], axis=1)              # (hidden, 2*out)
    head_b = jnp.concatenate([b2, b2s], axis=1)              # (1, 2*out)
    lanes = _round_up(2 * num_outputs, 128)
    pad_cols = lanes - 2 * num_outputs
    if pad_cols:
        head_w = jnp.pad(head_w, ((0, 0), (0, pad_cols)))
        head_b = jnp.pad(head_b, ((0, 0), (0, pad_cols)))

    # --- Batch grid: TM multiple of 8 (sublane), capped for VMEM friendliness ---
    tm = min(512, _round_up(batch, 8))
    padded_batch = _round_up(batch, tm)
    if padded_batch != batch:
        x = jnp.pad(x, ((0, padded_batch - batch), (0, 0)))
    grid = (padded_batch // tm,)

    out = pl.pallas_call(
        _policy_kernel,
        out_shape=jax.ShapeDtypeStruct((padded_batch, lanes), jnp.float32),
        grid_spec=pltpu.PrefetchScalarGridSpec(
            num_scalar_prefetch=0,
            grid=grid,
            in_specs=[
                pl.BlockSpec((tm, num_inputs), lambda i: (i, 0)),      # x tile
                pl.BlockSpec((num_inputs, hidden), lambda i: (0, 0)),  # w1 resident
                pl.BlockSpec((1, hidden), lambda i: (0, 0)),           # b1 resident
                pl.BlockSpec((hidden, lanes), lambda i: (0, 0)),       # fused head W
                pl.BlockSpec((1, lanes), lambda i: (0, 0)),            # fused head b
            ],
            out_specs=pl.BlockSpec((tm, lanes), lambda i: (i, 0)),
        ),
        compiler_params=pltpu.CompilerParams(
            dimension_semantics=("parallel",)),   # v7x: shard batch over 2 TCs
    )(x, w1, b1, head_w, head_b)

    out = out[:batch]
    mu = out[:, :num_outputs]
    sigma_sq = out[:, num_outputs:2 * num_outputs]
    # TODO(synk): sigma_sq has no positivity constraint here, matching the
    # reference Policy (softplus is applied downstream in select_action).
    return mu, sigma_sq


def init_policy_params(key, num_inputs, hidden_size, num_outputs):
    """Deterministic init mimicking nn.Linear's uniform(-1/sqrt(fan_in), ...)."""
    ks = jax.random.split(key, 6)

    def linear(kw, kb, fan_in, fan_out):
        bound = 1.0 / math.sqrt(fan_in)
        w = jax.random.uniform(kw, (fan_in, fan_out), jnp.float32, -bound, bound)
        b = jax.random.uniform(kb, (1, fan_out), jnp.float32, -bound, bound)
        return w, b

    w1, b1 = linear(ks[0], ks[1], num_inputs, hidden_size)
    w2, b2 = linear(ks[2], ks[3], hidden_size, num_outputs)
    w2s, b2s = linear(ks[4], ks[5], hidden_size, num_outputs)
    return (w1, b1, w2, b2, w2s, b2s)


def policy_reference(x, params):
    """Plain-JAX reference for correctness checking."""
    w1, b1, w2, b2, w2s, b2s = params
    h = jnp.maximum(x @ w1 + b1, 0.0)
    return h @ w2 + b2, h @ w2s + b2s


if __name__ == "__main__":
    key = jax.random.PRNGKey(0)
    k_x, k_p = jax.random.split(key)

    batch = 4
    num_inputs = 8      # e.g. observation dim
    hidden_size = 32
    num_outputs = 2     # action_space.shape[0]

    params = init_policy_params(k_p, num_inputs, hidden_size, num_outputs)
    x = jax.random.normal(k_x, (batch, num_inputs), jnp.float32)

    fwd = jax.jit(policy_forward)
    mu, sigma_sq = fwd(x, params)
    jax.block_until_ready((mu, sigma_sq))

    mu_ref, sigma_ref = policy_reference(x, params)
    assert mu.shape == (batch, num_outputs)
    assert sigma_sq.shape == (batch, num_outputs)
    assert jnp.allclose(mu, mu_ref, atol=1e-5, rtol=1e-5)
    assert jnp.allclose(sigma_sq, sigma_ref, atol=1e-5, rtol=1e-5)

    # Also exercise a batch that spans multiple grid steps / needs padding.
    x_big = jax.random.normal(k_x, (600, num_inputs), jnp.float32)
    mu_b, sig_b = fwd(x_big, params)
    jax.block_until_ready((mu_b, sig_b))
    mu_br, sig_br = policy_reference(x_big, params)
    assert jnp.allclose(mu_b, mu_br, atol=1e-5, rtol=1e-5)
    assert jnp.allclose(sig_b, sig_br, atol=1e-5, rtol=1e-5)

    print("KERNEL_OK")
</pallas_src>

<mosaic_0001>
module attributes {stable_mosaic.version = 11 : i64} {
  func.func @_policy_kernel(%arg0: i32, %arg1: memref<8x8xf32, #tpu.memory_space<vmem>>, %arg2: memref<8x32xf32, #tpu.memory_space<vmem>>, %arg3: memref<1x32xf32, #tpu.memory_space<vmem>>, %arg4: memref<32x128xf32, #tpu.memory_space<vmem>>, %arg5: memref<1x128xf32, #tpu.memory_space<vmem>>, %arg6: memref<8x128xf32, #tpu.memory_space<vmem>>) attributes {dimension_semantics = [#tpu.dimension_semantics<parallel>], iteration_bounds = array<i64: 1>, scalar_prefetch = 0 : i64, scratch_operands = 0 : i64, tpu.core_type = #tpu.core_type<tc>, window_params = [{transform_indices = @transform_0, window_bounds = array<i64: 8, 8>}, {pipeline_mode = #tpu.pipeline_mode<synchronous>, transform_indices = @transform_1, window_bounds = array<i64: 8, 32>}, {pipeline_mode = #tpu.pipeline_mode<synchronous>, transform_indices = @transform_2, window_bounds = array<i64: 1, 32>}, {pipeline_mode = #tpu.pipeline_mode<synchronous>, transform_indices = @transform_3, window_bounds = array<i64: 32, 128>}, {pipeline_mode = #tpu.pipeline_mode<synchronous>, transform_indices = @transform_4, window_bounds = array<i64: 1, 128>}, {transform_indices = @transform_5, window_bounds = array<i64: 8, 128>}]} {
    %c0 = arith.constant 0 : index
    %c0_0 = arith.constant 0 : index
    %0 = vector.load %arg1[%c0, %c0_0] : memref<8x8xf32, #tpu.memory_space<vmem>>, vector<8x8xf32>
    %c0_1 = arith.constant 0 : index
    %c0_2 = arith.constant 0 : index
    %1 = vector.load %arg2[%c0_1, %c0_2] : memref<8x32xf32, #tpu.memory_space<vmem>>, vector<8x32xf32>
    %cst = arith.constant dense<0.000000e+00> : vector<8x32xf32>
    %2 = tpu.matmul %0, %1, %cst {dimension_numbers = #tpu.dot_dimension_numbers<[1], [0], [0], [1], [0, 0, 1, 1], [], []>} : vector<8x8xf32>, vector<8x32xf32>, vector<8x32xf32> -> vector<8x32xf32>
    %c0_3 = arith.constant 0 : index
    %c0_4 = arith.constant 0 : index
    %3 = vector.load %arg3[%c0_3, %c0_4] : memref<1x32xf32, #tpu.memory_space<vmem>>, vector<1x32xf32>
    %4 = vector.broadcast %3 : vector<1x32xf32> to vector<8x32xf32>
    %5 = arith.addf %2, %4 : vector<8x32xf32>
    %cst_5 = arith.constant 0.000000e+00 : f32
    %6 = vector.broadcast %cst_5 : f32 to vector<8x32xf32>
    %7 = arith.maximumf %5, %6 : vector<8x32xf32>
    %c0_6 = arith.constant 0 : index
    %c0_7 = arith.constant 0 : index
    %8 = vector.load %arg4[%c0_6, %c0_7] : memref<32x128xf32, #tpu.memory_space<vmem>>, vector<32x128xf32>
    %cst_8 = arith.constant dense<0.000000e+00> : vector<8x128xf32>
    %9 = tpu.matmul %7, %8, %cst_8 {dimension_numbers = #tpu.dot_dimension_numbers<[1], [0], [0], [1], [0, 0, 1, 1], [], []>} : vector<8x32xf32>, vector<32x128xf32>, vector<8x128xf32> -> vector<8x128xf32>
    %c0_9 = arith.constant 0 : index
    %c0_10 = arith.constant 0 : index
    %10 = vector.load %arg5[%c0_9, %c0_10] : memref<1x128xf32, #tpu.memory_space<vmem>>, vector<1x128xf32>
    %11 = vector.broadcast %10 : vector<1x128xf32> to vector<8x128xf32>
    %12 = arith.addf %9, %11 : vector<8x128xf32>
    %c0_11 = arith.constant 0 : index
    %c0_12 = arith.constant 0 : index
    %13 = vector.load %arg6[%c0_11, %c0_12] : memref<8x128xf32, #tpu.memory_space<vmem>>, vector<8x128xf32>
    tpu.vector_store %arg6[%c0_11, %c0_12], %12 {strides = array<i32>} : memref<8x128xf32, #tpu.memory_space<vmem>>, vector<8x128xf32>,
    return
  }
  func.func @transform_0(%arg0: i32) -> (i32, i32) {
    %c0_i32 = arith.constant 0 : i32
    %c0_i32_0 = arith.constant 0 : i32
    return %arg0, %c0_i32 : i32, i32
  }
  func.func @transform_1(%arg0: i32) -> (i32, i32) {
    %c0_i32 = arith.constant 0 : i32
    %c0_i32_0 = arith.constant 0 : i32
    %c0_i32_1 = arith.constant 0 : i32
    return %c0_i32, %c0_i32_0 : i32, i32
  }
  func.func @transform_2(%arg0: i32) -> (i32, i32) {
    %c0_i32 = arith.constant 0 : i32
    %c0_i32_0 = arith.constant 0 : i32
    %c0_i32_1 = arith.constant 0 : i32
    return %c0_i32, %c0_i32_0 : i32, i32
  }
  func.func @transform_3(%arg0: i32) -> (i32, i32) {
    %c0_i32 = arith.constant 0 : i32
    %c0_i32_0 = arith.constant 0 : i32
    %c0_i32_1 = arith.constant 0 : i32
    return %c0_i32, %c0_i32_0 : i32, i32
  }
  func.func @transform_4(%arg0: i32) -> (i32, i32) {
    %c0_i32 = arith.constant 0 : i32
    %c0_i32_0 = arith.constant 0 : i32
    %c0_i32_1 = arith.constant 0 : i32
    return %c0_i32, %c0_i32_0 : i32, i32
  }
  func.func @transform_5(%arg0: i32) -> (i32, i32) {
    %c0_i32 = arith.constant 0 : i32
    %c0_i32_0 = arith.constant 0 : i32
    return %arg0, %c0_i32 : i32, i32
  }
}

</mosaic_0001>

<llo_original>
// kernel: policy_forward.1
$region0: #{policy_forward.1}
  #allocation0 [shape = 'u32[]', space=smem, size = 0x4, offset = 0x4, fixed_abs, tag = 'smem constant byte address 0x4 - core index']
  #allocation1 [shape = 'u32[144,128]{1,0:T(1,128)}', space=vmem, size = 0x12000, scoped, tag = 'internal scratch']
  %s0 = inlined_call_operand.vmem [shape: f32[8,8], index: 0, kind: input, shape index: {}]
  %s1 = inlined_call_operand.vmem [shape: f32[8,32], index: 1, kind: input, shape index: {}]
  %s2 = inlined_call_operand.vmem [shape: f32[1,32], index: 2, kind: input, shape index: {}]
  %s3 = inlined_call_operand.vmem [shape: f32[32,128], index: 3, kind: input, shape index: {}]
  %s4 = inlined_call_operand.vmem [shape: f32[1,128], index: 4, kind: input, shape index: {}]
  %s5 = inlined_call_operand.vmem [shape: f32[8,128], index: 5, kind: output, shape index: {}]
  %s6 = sld [smem:[#allocation0]]
  $region30: #{policy_forward.1} parent=0
    _
  %s8 = ssub.s32 1, %s6
  %s9 = scalar_select 0, %s8, %s6
  // Predicated region
  $region2: #{policy_forward.1} parent=0 // pred_check
    _
  $region3: #{policy_forward.1} parent=0 // pred_check_branch
    %11 = sbr.rel (0) target = $region5
  $region4: #{policy_forward.1} parent=0 // pred_region
    _
  $region5: #{policy_forward.1} parent=0 // pred_fallthru
    _
  // Predicated region
  $region6: #{policy_forward.1} parent=0 // pred_check
    _
  $region7: #{policy_forward.1} parent=0 // pred_check_branch
    %13 = sbr.rel (0) target = $region9
  $region8: #{policy_forward.1} parent=0 // pred_region
    _
  $region9: #{policy_forward.1} parent=0 // pred_fallthru
    _
  // Predicated region
  $region10: #{policy_forward.1} parent=0 // pred_check
    _
  $region11: #{policy_forward.1} parent=0 // pred_check_branch
    %15 = sbr.rel (0) target = $region13
  $region12: #{policy_forward.1} parent=0 // pred_region
    _
  $region13: #{policy_forward.1} parent=0 // pred_fallthru
    _
  // Predicated region
  $region14: #{policy_forward.1} parent=0 // pred_check
    _
  $region15: #{policy_forward.1} parent=0 // pred_check_branch
    %17 = sbr.rel (0) target = $region17
  $region16: #{policy_forward.1} parent=0 // pred_region
    _
  $region17: #{policy_forward.1} parent=0 // pred_fallthru
    _
  // Predicated region
  $region18: #{policy_forward.1} parent=0 // pred_check
    _
  $region19: #{policy_forward.1} parent=0 // pred_check_branch
    %19 = sbr.rel (0) target = $region21
  $region20: #{policy_forward.1} parent=0 // pred_region
    _
  $region21: #{policy_forward.1} parent=0 // pred_fallthru
    _
  %v20 = vld [vmem:[%s0] sm:$0xff]
  %v21 = vld [vmem:[%s1] sm:$0xff]
  %v22 = vld [vmem:[%s2] sm:$0x1]
  %v24 = vlaneseq
  %v25 = vshrl.u32 %v24, 7
  %v26 = vsub.s32 0, %v25
  %v27 = vrot.slane %v22, %v26
  %vm29 = vcmask 64512
  %v31 = vsel %vm29, %v20, 0
  %33 = vmatprep.subr.mxu0 0.0
  %34 = vmatpush1.msra.mxu0 %v21
  %35 = vmatprep.subr.mxu0 0.0
  %36 = vmatpush1.msra.mxu0 0.0
  %37 = vmatprep.subr.mxu0 0.0
  %38 = vmatpush1.msra.mxu0 0.0
  %39 = vmatprep.subr.mxu0 0.0
  %40 = vmatpush1.msra.mxu0 0.0
  %41 = vmatprep.subr.mxu0 0.0
  %42 = vmatpush1.msra.mxu0 0.0
  %43 = vmatprep.subr.mxu0 0.0
  %44 = vmatpush1.msra.mxu0 0.0
  %45 = vmatprep.subr.mxu0 0.0
  %46 = vmatpush1.msra.mxu0 0.0
  %47 = vmatprep.subr.mxu0 0.0
  %48 = vmatpush1.msra.mxu0 0.0
  %49 = vmatprep.subr.mxu0 0.0
  %50 = vmatpush1.msra.mxu0 0.0
  %51 = vmatprep.subr.mxu0 0.0
  %52 = vmatpush1.msra.mxu0 0.0
  %53 = vmatprep.subr.mxu0 0.0
  %54 = vmatpush1.msra.mxu0 0.0
  %55 = vmatprep.subr.mxu0 0.0
  %56 = vmatpush1.msra.mxu0 0.0
  %57 = vmatprep.subr.mxu0 0.0
  %58 = vmatpush1.msra.mxu0 0.0
  %59 = vmatprep.subr.mxu0 0.0
  %60 = vmatpush1.msra.mxu0 0.0
  %61 = vmatprep.subr.mxu0 0.0
  %62 = vmatpush1.msra.mxu0 0.0
  %63 = vmatprep.subr.mxu0 0.0
  %64 = vmatpush1.msra.mxu0 0.0
  %65 = vmatprep.subr.mxu0 0.0
  %66 = vmatpush1.msra.mxu0 0.0
  %67 = vmatprep.subr.mxu0 0.0
  %68 = vmatpush1.msra.mxu0 0.0
  %69 = vmatprep.subr.mxu0 0.0
  %70 = vmatpush1.msra.mxu0 0.0
  %71 = vmatprep.subr.mxu0 0.0
  %72 = vmatpush1.msra.mxu0 0.0
  %73 = vmatprep.subr.mxu0 0.0
  %74 = vmatpush1.msra.mxu0 0.0
  %75 = vmatprep.subr.mxu0 0.0
  %76 = vmatpush1.msra.mxu0 0.0
  %77 = vmatprep.subr.mxu0 0.0
  %78 = vmatpush1.msra.mxu0 0.0
  %79 = vmatprep.subr.mxu0 0.0
  %80 = vmatpush1.msra.mxu0 0.0
  %81 = vmatprep.subr.mxu0 0.0
  %82 = vmatpush1.msra.mxu0 0.0
  %83 = vmatprep.subr.mxu0 0.0
  %84 = vmatpush1.msra.mxu0 0.0
  %85 = vmatprep.subr.mxu0 0.0
  %86 = vmatpush1.msra.mxu0 0.0
  %87 = vmatprep.subr.mxu0 0.0
  %88 = vmatpush1.msra.mxu0 0.0
  %89 = vmatprep.subr.mxu0 0.0
  %90 = vmatpush1.msra.mxu0 0.0
  %91 = vmatprep.subr.mxu0 0.0
  %92 = vmatpush1.msra.mxu0 0.0
  %93 = vmatprep.subr.mxu0 0.0
  %94 = vmatpush1.msra.mxu0 0.0
  %95 = vmatprep.subr.mxu0 0.0
  %96 = vmatpush1.msra.mxu0 0.0
  %97 = vmatprep.mubr.f32.mxu0 0.0
  %98 = vmatmul.mubr.f32.gmra.mrb[0].mxu0 %v31
  %v99 = vpop.f32.mrb[0].mxu0
  %v100 = vadd.f32 %v27, %v99
  %v101 = vpop.f32.mrb[0].mxu0
  %102 = vdwg.mxu0
  %v103 = vmax.f32 %v100, 0.0
  %v104 = vld [vmem:[%s3] sm:$0xff]
  %v105 = vld [vmem:[%s3 + $0x8] sm:$0xff]
  %v106 = vld [vmem:[%s3 + $0x10] sm:$0xff]
  %v107 = vld [vmem:[%s3 + $0x18] sm:$0xff]
  %v108 = vld [vmem:[%s4] sm:$0x1]
  %v110 = vlaneseq
  %v111 = vshrl.u32 %v110, 7
  %v112 = vsub.s32 0, %v111
  %v113 = vrot.slane %v108, %v112
  %vm115 = vcmask 261120
  %v117 = vsel %vm115, %v103, 0
  %119 = vmatprep.subr.mxu0 0.0
  %120 = vmatpush1.msra.mxu0 %v104
  %121 = vmatprep.subr.mxu0 0.0
  %122 = vmatpush1.msra.mxu0 %v105
  %123 = vmatprep.subr.mxu0 0.0
  %124 = vmatpush1.msra.mxu0 %v106
  %125 = vmatprep.subr.mxu0 0.0
  %126 = vmatpush1.msra.mxu0 %v107
  %127 = vmatprep.subr.mxu0 0.0
  %128 = vmatpush1.msra.mxu0 0.0
  %129 = vmatprep.subr.mxu0 0.0
  %130 = vmatpush1.msra.mxu0 0.0
  %131 = vmatprep.subr.mxu0 0.0
  %132 = vmatpush1.msra.mxu0 0.0
  %133 = vmatprep.subr.mxu0 0.0
  %134 = vmatpush1.msra.mxu0 0.0
  %135 = vmatprep.subr.mxu0 0.0
  %136 = vmatpush1.msra.mxu0 0.0
  %137 = vmatprep.subr.mxu0 0.0
  %138 = vmatpush1.msra.mxu0 0.0
  %139 = vmatprep.subr.mxu0 0.0
  %140 = vmatpush1.msra.mxu0 0.0
  %141 = vmatprep.subr.mxu0 0.0
  %142 = vmatpush1.msra.mxu0 0.0
  %143 = vmatprep.subr.mxu0 0.0
  %144 = vmatpush1.msra.mxu0 0.0
  %145 = vmatprep.subr.mxu0 0.0
  %146 = vmatpush1.msra.mxu0 0.0
  %147 = vmatprep.subr.mxu0 0.0
  %148 = vmatpush1.msra.mxu0 0.0
  %149 = vmatprep.subr.mxu0 0.0
  %150 = vmatpush1.msra.mxu0 0.0
  %151 = vmatprep.subr.mxu0 0.0
  %152 = vmatpush1.msra.mxu0 0.0
  %153 = vmatprep.subr.mxu0 0.0
  %154 = vmatpush1.msra.mxu0 0.0
  %155 = vmatprep.subr.mxu0 0.0
  %156 = vmatpush1.msra.mxu0 0.0
  %157 = vmatprep.subr.mxu0 0.0
  %158 = vmatpush1.msra.mxu0 0.0
  %159 = vmatprep.subr.mxu0 0.0
  %160 = vmatpush1.msra.mxu0 0.0
  %161 = vmatprep.subr.mxu0 0.0
  %162 = vmatpush1.msra.mxu0 0.0
  %163 = vmatprep.subr.mxu0 0.0
  %164 = vmatpush1.msra.mxu0 0.0
  %165 = vmatprep.subr.mxu0 0.0
  %166 = vmatpush1.msra.mxu0 0.0
  %167 = vmatprep.subr.mxu0 0.0
  %168 = vmatpush1.msra.mxu0 0.0
  %169 = vmatprep.subr.mxu0 0.0
  %170 = vmatpush1.msra.mxu0 0.0
  %171 = vmatprep.subr.mxu0 0.0
  %172 = vmatpush1.msra.mxu0 0.0
  %173 = vmatprep.subr.mxu0 0.0
  %174 = vmatpush1.msra.mxu0 0.0
  %175 = vmatprep.subr.mxu0 0.0
  %176 = vmatpush1.msra.mxu0 0.0
  %177 = vmatprep.subr.mxu0 0.0
  %178 = vmatpush1.msra.mxu0 0.0
  %179 = vmatprep.subr.mxu0 0.0
  %180 = vmatpush1.msra.mxu0 0.0
  %181 = vmatprep.subr.mxu0 0.0
  %182 = vmatpush1.msra.mxu0 0.0
  %183 = vmatprep.mubr.f32.mxu0 0.0
  %184 = vmatmul.mubr.f32.gmra.mrb[0].mxu0 %v117
  %v185 = vpop.f32.mrb[0].mxu0
  %v186 = vadd.f32 %v113, %v185
  %v187 = vpop.f32.mrb[0].mxu0
  %188 = vdwg.mxu0
  %189 = vst [vmem:[%s5] sm:$0xff] %v186
  // Predicated region
  $region22: #{policy_forward.1} parent=0 // pred_check
    _
  $region23: #{policy_forward.1} parent=0 // pred_check_branch
    %191 = sbr.rel (0) target = $region25
  $region24: #{policy_forward.1} parent=0 // pred_region
    _
  $region25: #{policy_forward.1} parent=0 // pred_fallthru
    _
  // Predicated region
  $region26: #{policy_forward.1} parent=0 // pred_check
    _
  $region27: #{policy_forward.1} parent=0 // pred_check_branch
    %193 = sbr.rel (0) target = $region29
  $region28: #{policy_forward.1} parent=0 // pred_region
    _
  $region29: #{policy_forward.1} parent=0 // pred_fallthru
    _

</llo_original>
